<compile_context>
chip_gen: v6e
topology: v6e:2x2x1
jax: 0.10.0
libtpu: 0.0.40
codegen_flags: <defaults>
</compile_context>

<pallas_src>
import jax
import jax.numpy as jnp
from jax.experimental import pallas as pl
from jax.experimental.pallas import tpu as pltpu


def _cat_mm_kernel(packed_ref, o_ref):
    # packed: (6, 2) f32 -- rows 0:2 = x1, rows 2:4 = x2, rows 4:6 = x3.
    p = packed_ref[...]
    x1 = p[0:2, :]
    x2 = p[2:4, :]
    x3 = p[4:6, :]

    # v = x2 @ x3 as VPU broadcast-multiply-adds (K=2; keep off the MXU).
    v = x2[:, 0:1] * x3[0:1, :] + x2[:, 1:2] * x3[1:2, :]      # (2, 2)
    # u = x1 @ v  (second matmul halved via the algebraic identity above).
    u = x1[:, 0:1] * v[0:1, :] + x1[:, 1:2] * v[1:2, :]        # (2, 2)

    # w = cat([u, u], axis=1)  -> (2, 4); single lane-axis concat.
    w = jnp.concatenate([u, u], axis=1).astype(o_ref.dtype)

    # out = cat([w, w, w], axis=0) via three static-slice stores of the same
    # (2, 4) value -- no extra XLU copies to build a (6, 4) intermediate.
    o_ref[0:2, :] = w
    o_ref[2:4, :] = w
    o_ref[4:6, :] = w


def cat_mm(x1, x2, x3):
    assert x1.shape == (2, 2) and x2.shape == (2, 2) and x3.shape == (2, 2)
    out_shape = (6, 4)

    # Pack the three tiny operands into one array -> one DMA, one VMEM window.
    packed = jnp.concatenate(
        [x1.astype(jnp.float32), x2.astype(jnp.float32), x3.astype(jnp.float32)],
        axis=0,
    )  # (6, 2)

    # Gridless call: whole arrays resident in VMEM, single kernel invocation,
    # no software-pipelining / double-buffering overhead.
    return pl.pallas_call(
        _cat_mm_kernel,
        out_shape=jax.ShapeDtypeStruct(out_shape, jnp.float32),
        in_specs=[pl.BlockSpec(memory_space=pltpu.MemorySpace.VMEM)],
        out_specs=pl.BlockSpec(memory_space=pltpu.MemorySpace.VMEM),
    )(packed)


def cat_mm_ref(x1, x2, x3):
    v = x2 @ x3
    v = jnp.concatenate([v, v], axis=1)
    v = x1 @ v
    return jnp.concatenate([v, v, v], axis=0)


if __name__ == "__main__":
    key = jax.random.PRNGKey(0)
    k1, k2, k3 = jax.random.split(key, 3)
    x1 = jax.random.normal(k1, (2, 2), dtype=jnp.float32)
    x2 = jax.random.normal(k2, (2, 2), dtype=jnp.float32)
    x3 = jax.random.normal(k3, (2, 2), dtype=jnp.float32)

    out = cat_mm(x1, x2, x3)
    jax.block_until_ready(out)

    ref = cat_mm_ref(x1, x2, x3)
    assert out.shape == (6, 4), out.shape
    assert jnp.allclose(out, ref, atol=1e-5, rtol=1e-5), "mismatch vs reference"

    print("KERNEL_OK")
</pallas_src>

<mosaic_0001>
module attributes {stable_mosaic.version = 11 : i64} {
  func.func @_cat_mm_kernel(%arg0: memref<6x2xf32, #tpu.memory_space<vmem>>, %arg1: memref<6x4xf32, #tpu.memory_space<vmem>>) attributes {dimension_semantics = [], scalar_prefetch = 0 : i64, scratch_operands = 0 : i64, tpu.core_type = #tpu.core_type<tc>} {
    %c0 = arith.constant 0 : index
    %c0_0 = arith.constant 0 : index
    %0 = vector.load %arg0[%c0, %c0_0] : memref<6x2xf32, #tpu.memory_space<vmem>>, vector<6x2xf32>
    %1 = vector.extract_strided_slice %0 {offsets = [0, 0], sizes = [2, 2], strides = [1, 1]} : vector<6x2xf32> to vector<2x2xf32>
    %2 = vector.extract_strided_slice %0 {offsets = [2, 0], sizes = [2, 2], strides = [1, 1]} : vector<6x2xf32> to vector<2x2xf32>
    %3 = vector.extract_strided_slice %0 {offsets = [4, 0], sizes = [2, 2], strides = [1, 1]} : vector<6x2xf32> to vector<2x2xf32>
    %4 = vector.extract_strided_slice %2 {offsets = [0, 0], sizes = [2, 1], strides = [1, 1]} : vector<2x2xf32> to vector<2x1xf32>
    %5 = vector.extract_strided_slice %3 {offsets = [0, 0], sizes = [1, 2], strides = [1, 1]} : vector<2x2xf32> to vector<1x2xf32>
    %6 = vector.broadcast %4 : vector<2x1xf32> to vector<2x2xf32>
    %7 = vector.broadcast %5 : vector<1x2xf32> to vector<2x2xf32>
    %8 = arith.mulf %6, %7 : vector<2x2xf32>
    %9 = vector.extract_strided_slice %2 {offsets = [0, 1], sizes = [2, 1], strides = [1, 1]} : vector<2x2xf32> to vector<2x1xf32>
    %10 = vector.extract_strided_slice %3 {offsets = [1, 0], sizes = [1, 2], strides = [1, 1]} : vector<2x2xf32> to vector<1x2xf32>
    %11 = vector.broadcast %9 : vector<2x1xf32> to vector<2x2xf32>
    %12 = vector.broadcast %10 : vector<1x2xf32> to vector<2x2xf32>
    %13 = arith.mulf %11, %12 : vector<2x2xf32>
    %14 = arith.addf %8, %13 : vector<2x2xf32>
    %15 = vector.extract_strided_slice %1 {offsets = [0, 0], sizes = [2, 1], strides = [1, 1]} : vector<2x2xf32> to vector<2x1xf32>
    %16 = vector.extract_strided_slice %14 {offsets = [0, 0], sizes = [1, 2], strides = [1, 1]} : vector<2x2xf32> to vector<1x2xf32>
    %17 = vector.broadcast %15 : vector<2x1xf32> to vector<2x2xf32>
    %18 = vector.broadcast %16 : vector<1x2xf32> to vector<2x2xf32>
    %19 = arith.mulf %17, %18 : vector<2x2xf32>
    %20 = vector.extract_strided_slice %1 {offsets = [0, 1], sizes = [2, 1], strides = [1, 1]} : vector<2x2xf32> to vector<2x1xf32>
    %21 = vector.extract_strided_slice %14 {offsets = [1, 0], sizes = [1, 2], strides = [1, 1]} : vector<2x2xf32> to vector<1x2xf32>
    %22 = vector.broadcast %20 : vector<2x1xf32> to vector<2x2xf32>
    %23 = vector.broadcast %21 : vector<1x2xf32> to vector<2x2xf32>
    %24 = arith.mulf %22, %23 : vector<2x2xf32>
    %25 = arith.addf %19, %24 : vector<2x2xf32>
    %26 = tpu.concatenate %25, %25 in 1 : vector<2x2xf32>, vector<2x2xf32> -> vector<2x4xf32>
    %c0_1 = arith.constant 0 : index
    %c0_2 = arith.constant 0 : index
    %27 = vector.load %arg1[%c0_1, %c0_2] : memref<6x4xf32, #tpu.memory_space<vmem>>, vector<2x4xf32>
    tpu.vector_store %arg1[%c0_1, %c0_2], %26 {strides = array<i32>} : memref<6x4xf32, #tpu.memory_space<vmem>>, vector<2x4xf32>,
    %c2 = arith.constant 2 : index
    %c0_3 = arith.constant 0 : index
    %28 = vector.load %arg1[%c2, %c0_3] : memref<6x4xf32, #tpu.memory_space<vmem>>, vector<2x4xf32>
    tpu.vector_store %arg1[%c2, %c0_3], %26 {strides = array<i32>} : memref<6x4xf32, #tpu.memory_space<vmem>>, vector<2x4xf32>,
    %c4 = arith.constant 4 : index
    %c0_4 = arith.constant 0 : index
    %29 = vector.load %arg1[%c4, %c0_4] : memref<6x4xf32, #tpu.memory_space<vmem>>, vector<2x4xf32>
    tpu.vector_store %arg1[%c4, %c0_4], %26 {strides = array<i32>} : memref<6x4xf32, #tpu.memory_space<vmem>>, vector<2x4xf32>,
    return
  }
}

</mosaic_0001>

<llo_original>
// kernel: tpu_custom_call.1
$region0: #{tpu_custom_call.1}
  #allocation0 [shape = 'u32[]', space=smem, size = 0x4, offset = 0x4, fixed_abs, tag = 'smem constant byte address 0x4 - core index']
  #allocation1 [shape = 'u32[144,128]{1,0:T(1,128)}', space=vmem, size = 0x12000, scoped, tag = 'internal scratch']
  %s0 = inlined_call_operand.vmem [shape: f32[6,2], index: 0, kind: input, shape index: {}]
  %s1 = inlined_call_operand.vmem [shape: f32[6,4], index: 1, kind: output, shape index: {}]
  %s2 = sld [smem:[#allocation0]]
  $region14: #{tpu_custom_call.1} parent=0
    _
  %s4 = ssub.s32 1, %s2
  %s5 = scalar_select 0, %s4, %s2
  // Predicated region
  $region2: #{tpu_custom_call.1} parent=0 // pred_check
    _
  $region3: #{tpu_custom_call.1} parent=0 // pred_check_branch
    %7 = sbr.rel (0) target = $region5
  $region4: #{tpu_custom_call.1} parent=0 // pred_region
    _
  $region5: #{tpu_custom_call.1} parent=0 // pred_fallthru
    _
  %v8 = vld [vmem:[%s0] sm:$0x3f]
  %10 = vset.pattern.permute.xlu0 0
  %11 = vperm.xlu0 %10, %v8
  %v12 = vpop.permute.xlu0 %11
  %v14 = vlaneseq
  %v15 = vshrl.u32 %v14, 7
  %v16 = vsub.s32 4, %v15
  %v17 = vrot.slane %v8, %v16
  %v18 = vmul.f32 %v12, %v17
  %19 = vset.pattern.permute.xlu0 1
  %20 = vperm.xlu0 %19, %v8
  %v21 = vpop.permute.xlu0 %20
  %v23 = vlaneseq
  %v24 = vshrl.u32 %v23, 7
  %v25 = vsub.s32 5, %v24
  %v26 = vrot.slane %v8, %v25
  %v27 = vmul.f32 %v21, %v26
  %v28 = vadd.f32 %v18, %v27
  %v29 = vlaneseq
  %v30 = vshrl.u32 %v29, 7
  %v31 = vsub.s32 2, %v30
  %v32 = vrot.slane %v28, %v31
  %v33 = vmul.f32 %v12, %v32
  %v34 = vlaneseq
  %v35 = vshrl.u32 %v34, 7
  %v36 = vsub.s32 3, %v35
  %v37 = vrot.slane %v28, %v36
  %v38 = vmul.f32 %v21, %v37
  %v39 = vadd.f32 %v33, %v38
  %41 = vrot.lane.b32.xlu0 %v39, 2
  %v42 = vpop.permute.xlu0 %41
  %vm44 = vcmask 15360
  %v45 = vsel %vm44, %v39, %v42
  %vm46 = vcmask 25600
  %47 = vst.msk [vmem:[%s1] sm:$0x3] %vm46, %v45
  %48 = vst.msk [vmem:[%s1 + $0x2] sm:$0x3] %vm46, %v45
  %49 = vst.msk [vmem:[%s1 + $0x4] sm:$0x3] %vm46, %v45
  // Predicated region
  $region6: #{tpu_custom_call.1} parent=0 // pred_check
    _
  $region7: #{tpu_custom_call.1} parent=0 // pred_check_branch
    %51 = sbr.rel (0) target = $region9
  $region8: #{tpu_custom_call.1} parent=0 // pred_region
    _
  $region9: #{tpu_custom_call.1} parent=0 // pred_fallthru
    _
  // Predicated region
  $region10: #{tpu_custom_call.1} parent=0 // pred_check
    _
  $region11: #{tpu_custom_call.1} parent=0 // pred_check_branch
    %53 = sbr.rel (0) target = $region13
  $region12: #{tpu_custom_call.1} parent=0 // pred_region
    _
  $region13: #{tpu_custom_call.1} parent=0 // pred_fallthru
    _

</llo_original>
